<compile_context>
chip_gen: v7x
topology: tpu7x:2x2x1
jax: 0.10.0
libtpu: 0.0.40
codegen_flags: <defaults>
</compile_context>

<pallas_src>
import functools

import jax
import jax.numpy as jnp
from jax import lax
from jax.experimental import pallas as pl
from jax.experimental.pallas import tpu as pltpu


_PAD_COORD = 1.0e9   # sentinel coordinate for padded points (far from everything)


def _density_tiling(n, chunk_rows=None):
    """Generation-aware chunk / pad / vmem-limit selection for the density pass."""
    try:
        vmem_cap = int(pltpu.get_tpu_info().vmem_capacity_bytes)
    except Exception:  # interpret mode / older jax / non-TPU tracing
        vmem_cap = 64 << 20
    if vmem_cap >= (100 << 20):      # v5e / v6e: 128 MiB physical VMEM
        target_elems, vmem_limit = 4 << 20, 96 << 20
    else:                            # v7x (64 MiB) or unknown: stay conservative
        target_elems, vmem_limit = 1 << 20, 40 << 20

    if chunk_rows is not None:
        chunk = int(chunk_rows)
        assert chunk > 0 and chunk % 8 == 0, "chunk_rows must be a positive multiple of 8"
    else:
        # CHUNK: multiple of 128 with CHUNK * N * 4B ~= the target slab size.
        chunk = max(128, ((target_elems // max(n, 1)) // 128) * 128)
        chunk = min(chunk, ((n + 127) // 128) * 128)
    n_pad = ((n + chunk - 1) // chunk) * chunk
    return chunk, n_pad, vmem_limit


# --------------------------- Kernel A: density pass ---------------------------
def _density_kernel(lhs_ref, rhs_ref, dens_ref, acc_ref, *, chunk, n_pad):
    c = pl.program_id(1)

    @pl.when(c == 0)
    def _():
        acc_ref[...] = jnp.zeros_like(acc_ref)

    # Lane-slice the resident slab: (8, CHUNK) LHS for this chunk of points i.
    start = pl.multiple_of(c * chunk, chunk)
    lhs_chunk = lhs_ref[:, pl.ds(start, chunk)]                          # (8, CHUNK)

    # dist^2(i, j) - r^2 for CHUNK points i vs all N_pad points j, via one K=8
    # MXU contraction (transposed-LHS form; no separate (N, 8) HBM stream).
    gram = lax.dot_general(lhs_chunk, rhs_ref[...],
                           dimension_numbers=(((0,), (0,)), ((), ())),
                           preferred_element_type=jnp.float32)           # (CHUNK, N_pad)
    within = (gram <= 0.0).astype(jnp.float32)

    # Sublane-partial accumulation: regroup rows 8-at-a-time (layout-preserving
    # reshape) and add -> pure VPU; single cross-sublane reduce deferred to finalize.
    acc_ref[...] += jnp.sum(within.reshape(chunk // 8, 8, n_pad), axis=0)

    # TODO(synk): for B < num TensorCores (v7x), the chunk axis could also be
    # split core-parallel with per-core partial density scratches combined here.
    @pl.when(c == pl.num_programs(1) - 1)
    def _():
        dens_ref[...] = jnp.sum(acc_ref[...], axis=0, keepdims=True)     # (1, N_pad)


# -------------------------- Kernel B: serial weighted FPS ---------------------
def _fps_kernel(coords_ref, dweight_ref, scoords_ref, out_ref, *, npoint, n_pad):
    nlanes = n_pad // 8
    wx = coords_ref[0]               # (8, nlanes) mw-scaled x, packed layout
    wy = coords_ref[1]
    wz = coords_ref[2]
    dweight = dweight_ref[...]       # (8, nlanes), exactly 0 on padded entries

    # Packed argmax key: clear the low log2(next_pow2(N_pad)) bits of the
    # (non-negative) f32 bit pattern and OR in the complemented flat index, so a
    # single max reduce yields the max value with ties broken to the smallest
    # index.  NOTE: value comparison is quantised to next_pow2(N_pad) ULPs;
    # near-ties may pick a slightly different (still near-furthest) point.
    idx_pow2 = 1
    while idx_pow2 < n_pad:
        idx_pow2 *= 2
    idx_mask = idx_pow2 - 1
    inv_mask = jnp.int32(~idx_mask)
    sub = lax.broadcasted_iota(jnp.int32, (8, nlanes), 0)
    lane = lax.broadcasted_iota(jnp.int32, (8, nlanes), 1)
    comp_idx = idx_mask - (sub * nlanes + lane)                          # (8, nlanes)

    temp0 = jnp.full((8, nlanes), 1e10, dtype=jnp.float32)
    out_ref[0, 0] = jnp.int32(0)     # FPS seeds the first sample at index 0

    def body(k, carry):
        temp, last = carry
        # Scalar gather of the previously selected (pre-scaled) point from SMEM.
        sx = scoords_ref[last]
        sy = scoords_ref[n_pad + last]
        sz = scoords_ref[2 * n_pad + last]
        dman = jnp.abs(wx - sx) + jnp.abs(wy - sy) + jnp.abs(wz - sz)    # weighted L1
        temp = jnp.minimum(temp, dman * dweight)
        # Fused max + argmax: one cross-lane reduce on the packed key.
        bits = pltpu.bitcast(temp, jnp.int32)   # temp >= 0 => monotone int ordering
        key = (bits & inv_mask) | comp_idx
        best = idx_mask - (jnp.max(key) & idx_mask)
        out_ref[0, k] = best                    # scalar SMEM store, off the VPU path
        return temp, best

    lax.fori_loop(1, npoint, body, (temp0, jnp.int32(0)), unroll=2)


def density_and_manhattan_meanwhile_furthest_point_sample(points, npoint, r,
                                                          manhattan_weights,
                                                          alpha=1.0, chunk_rows=None):
    """points: (B, N, 3) float32 -> (B, npoint) int32 sampled indices."""
    points = points.astype(jnp.float32)
    b, n, _ = points.shape
    npoint = int(npoint)
    mw = [float(w) for w in manhattan_weights]
    assert all(w >= 0.0 for w in mw), (
        "manhattan_weights must be non-negative (|w*dx| = w*|dx| folding assumes w >= 0)")

    chunk, n_pad, vmem_limit = _density_tiling(n, chunk_rows)
    nchunks = n_pad // chunk
    nlanes = n_pad // 8

    if n_pad > n:
        pad = jnp.full((b, n_pad - n, 3), _PAD_COORD, jnp.float32)
        pts = jnp.concatenate([points, pad], axis=1)
    else:
        pts = points
    x = pts[..., 0]
    y = pts[..., 1]
    z = pts[..., 2]                                                       # (B, n_pad)
    sq = x * x + y * y + z * z
    ones = jnp.ones_like(x)
    zeros = jnp.zeros_like(x)
    r2 = jnp.float32(float(r) * float(r))

    # Augmented K=8 factors so the MXU directly produces dist^2 - r^2.
    # (Gram form loses a little precision vs (pi-pj)^2 for far-from-origin data.)
    lhs_aug = jnp.stack([x, y, z, sq, ones, zeros, zeros, zeros], axis=1)          # (B, 8, n_pad)
    rhs_aug = jnp.stack([-2.0 * x, -2.0 * y, -2.0 * z, ones, sq - r2,
                         zeros, zeros, zeros], axis=1)                             # (B, 8, n_pad)

    density = pl.pallas_call(
        functools.partial(_density_kernel, chunk=chunk, n_pad=n_pad),
        out_shape=jax.ShapeDtypeStruct((b, 1, n_pad), jnp.float32),
        grid=(b, nchunks),
        in_specs=[
            pl.BlockSpec((None, 8, n_pad), lambda i, c: (i, 0, 0)),   # resident LHS slab
            pl.BlockSpec((None, 8, n_pad), lambda i, c: (i, 0, 0)),   # resident RHS slab
        ],
        out_specs=pl.BlockSpec((None, 1, n_pad), lambda i, c: (i, 0, 0)),
        scratch_shapes=[pltpu.VMEM((8, n_pad), jnp.float32)],         # sublane partials
        compiler_params=pltpu.CompilerParams(
            dimension_semantics=("parallel", "arbitrary"),
            vmem_limit_bytes=vmem_limit),
    )(lhs_aug, rhs_aug)                                                # (B, 1, n_pad)

    # TODO(synk): exact density/Manhattan weighting of the original CUDA op is
    # undocumented; inferred semantics kept from the previous version: denser
    # points are exponentially down-weighted, FPS metric is weighted L1.
    density = density.reshape(b, n_pad)
    valid = (jnp.arange(n_pad) < n)[None, :]
    dweight = jnp.where(valid, jnp.exp(-density * jnp.float32(alpha / n)), 0.0)
    dweight_packed = dweight.astype(jnp.float32).reshape(b, 8, nlanes)

    # mw-pre-scaled coordinates: packed (8, N_pad/8) slabs for the vector path,
    # flat (3*N_pad) rows for the per-iteration scalar SMEM gathers.
    wx = jnp.float32(mw[0]) * x
    wy = jnp.float32(mw[1]) * y
    wz = jnp.float32(mw[2]) * z
    coords_packed = jnp.stack([wx, wy, wz], axis=1).reshape(b, 3, 8, nlanes)
    coords_flat = jnp.concatenate([wx, wy, wz], axis=1)                  # (B, 3*n_pad)

    return pl.pallas_call(
        functools.partial(_fps_kernel, npoint=npoint, n_pad=n_pad),
        out_shape=jax.ShapeDtypeStruct((b, npoint), jnp.int32),
        grid=(b,),
        in_specs=[
            pl.BlockSpec((None, 3, 8, nlanes), lambda i: (i, 0, 0, 0)),
            pl.BlockSpec((None, 8, nlanes), lambda i: (i, 0, 0)),
            # squeezed 1D per-batch SMEM block (avoids 8-row SMEM padding and
            # shipping all batches' coords every step)
            pl.BlockSpec((None, 3 * n_pad), lambda i: (i, 0),
                         memory_space=pltpu.MemorySpace.SMEM),
        ],
        out_specs=pl.BlockSpec((1, npoint), lambda i: (i, 0),
                               memory_space=pltpu.MemorySpace.SMEM),
        compiler_params=pltpu.CompilerParams(
            dimension_semantics=("parallel",)),
    )(coords_packed, dweight_packed, coords_flat)


class PointsSamplerDensityAndManhattanMeanwhile:
    """JAX/Pallas port of the PyTorch module (D-FPS path)."""

    def __init__(self, num_point, r=(0.5,), manhattan_weights=((1.0, 1.0, 1.0),),
                 fps_mod_list=('D-FPS',), fps_sample_range_list=(-1,)):
        assert len(num_point) == len(fps_mod_list) == len(manhattan_weights) == len(r)
        self.num_point = list(num_point)
        self.r = list(r)
        self.manhattan_weights = [list(w) for w in manhattan_weights]
        self.fps_mod_list = list(fps_mod_list)
        self.fps_sample_range_list = list(fps_sample_range_list)
        for m in self.fps_mod_list:
            if m != 'D-FPS':
                # TODO(synk): F-FPS / FS require furthest_point_sample_with_dist
                # (feature-space FPS); not implemented here.
                raise NotImplementedError(f"Only D-FPS is implemented, got {m}")

    def __call__(self, points_xyz, features):
        """points_xyz: (B, N, 3), features: (B, C, N) -> (B, sum(num_point)) int32."""
        indices = []
        last_fps_end_index = 0
        for fps_sample_range, npoint, r, mw in zip(
                self.fps_sample_range_list, self.num_point, self.r, self.manhattan_weights):
            assert fps_sample_range < points_xyz.shape[1]
            if fps_sample_range == -1:
                sample_points_xyz = points_xyz[:, last_fps_end_index:]
                _ = features[:, :, last_fps_end_index:]
            else:
                sample_points_xyz = points_xyz[:, last_fps_end_index:fps_sample_range]
                _ = features[:, :, last_fps_end_index:fps_sample_range]
            fps_idx = density_and_manhattan_meanwhile_furthest_point_sample(
                sample_points_xyz, npoint, r, mw, alpha=1.0)
            indices.append(fps_idx + last_fps_end_index)
            # Mirrors the upstream module's bookkeeping (including its -1 quirk).
            last_fps_end_index += fps_sample_range
        return jnp.concatenate(indices, axis=1)


if __name__ == "__main__":
    key = jax.random.PRNGKey(0)
    kp, kf = jax.random.split(key)
    B, N, C, NPOINT = 2, 256, 4, 32
    points_xyz = jax.random.uniform(kp, (B, N, 3), jnp.float32, minval=-1.0, maxval=1.0)
    features = jax.random.normal(kf, (B, C, N), jnp.float32)

    sampler = PointsSamplerDensityAndManhattanMeanwhile(
        num_point=[NPOINT], r=[0.5], manhattan_weights=[[1.0, 0.8, 1.2]],
        fps_mod_list=['D-FPS'], fps_sample_range_list=[-1])

    idx = jax.block_until_ready(sampler(points_xyz, features))
    assert idx.shape == (B, NPOINT), idx.shape
    assert idx.dtype == jnp.int32, idx.dtype
    assert bool(jnp.all((idx >= 0) & (idx < N)))
    assert bool(jnp.all(idx[:, 0] == 0))   # FPS seeds at index 0

    # Multi-chunk density accumulation must agree exactly with the single-chunk
    # result (pure regrouping of integer-valued f32 adds; same padding).
    idx_chunked = jax.block_until_ready(
        density_and_manhattan_meanwhile_furthest_point_sample(
            points_xyz, NPOINT, 0.5, [1.0, 0.8, 1.2], alpha=1.0, chunk_rows=64))
    assert idx_chunked.shape == (B, NPOINT)
    assert bool(jnp.all(idx_chunked == idx))

    print("KERNEL_OK")
</pallas_src>

<mosaic_0001>
module attributes {stable_mosaic.version = 11 : i64} {
  func.func @_density_kernel(%arg0: i32, %arg1: i32, %arg2: memref<1x8x256xf32, #tpu.memory_space<vmem>>, %arg3: memref<1x8x256xf32, #tpu.memory_space<vmem>>, %arg4: memref<1x1x256xf32, #tpu.memory_space<vmem>>, %arg5: memref<8x256xf32, #tpu.memory_space<vmem>>) attributes {dimension_semantics = [#tpu.dimension_semantics<parallel>, #tpu.dimension_semantics<arbitrary>], iteration_bounds = array<i64: 2, 1>, scalar_prefetch = 0 : i64, scratch_operands = 1 : i64, tpu.core_type = #tpu.core_type<tc>, window_params = [{transform_indices = @transform_0, window_bounds = array<i64: 1, 8, 256>}, {transform_indices = @transform_1, window_bounds = array<i64: 1, 8, 256>}, {transform_indices = @transform_2, window_bounds = array<i64: 1, 1, 256>}]} {
    %c0_i32 = arith.constant 0 : i32
    %0 = arith.cmpi eq, %arg1, %c0_i32 : i32
    %1 = arith.extui %0 : i1 to i32
    %c0_i32_0 = arith.constant 0 : i32
    %2 = arith.cmpi ne, %1, %c0_i32_0 : i32
    scf.if %2 {
      %cst_13 = arith.constant 0.000000e+00 : f32
      %23 = vector.broadcast %cst_13 : f32 to vector<8x256xf32>
      %c0_14 = arith.constant 0 : index
      %c0_15 = arith.constant 0 : index
      %24 = vector.load %arg5[%c0_14, %c0_15] : memref<8x256xf32, #tpu.memory_space<vmem>>, vector<8x256xf32>
      tpu.vector_store %arg5[%c0_14, %c0_15], %23 {strides = array<i32>} : memref<8x256xf32, #tpu.memory_space<vmem>>, vector<8x256xf32>,
    } else {
    }
    %c256_i32 = arith.constant 256 : i32
    %3 = arith.muli %arg1, %c256_i32 : i32
    %4 = tpu.assume_multiple %3, 256 : i32
    %c0 = arith.constant 0 : index
    %c0_1 = arith.constant 0 : index
    %5 = arith.index_cast %4 : i32 to index
    %6 = vector.load %arg2[%c0, %c0_1, %5] : memref<1x8x256xf32, #tpu.memory_space<vmem>>, vector<1x8x256xf32>
    %7 = vector.shape_cast %6 : vector<1x8x256xf32> to vector<8x256xf32>
    %c0_2 = arith.constant 0 : index
    %c0_3 = arith.constant 0 : index
    %c0_4 = arith.constant 0 : index
    %8 = vector.load %arg3[%c0_2, %c0_3, %c0_4] : memref<1x8x256xf32, #tpu.memory_space<vmem>>, vector<1x8x256xf32>
    %9 = vector.shape_cast %8 : vector<1x8x256xf32> to vector<8x256xf32>
    %cst = arith.constant dense<0.000000e+00> : vector<256x256xf32>
    %10 = tpu.matmul %7, %9, %cst {dimension_numbers = #tpu.dot_dimension_numbers<[0], [0], [1], [1], [0, 1, 1, 1], [], []>} : vector<8x256xf32>, vector<8x256xf32>, vector<256x256xf32> -> vector<256x256xf32>
    %cst_5 = arith.constant 0.000000e+00 : f32
    %11 = vector.broadcast %cst_5 : f32 to vector<256x256xf32>
    %12 = arith.cmpf ole, %10, %11 : vector<256x256xf32>
    %13 = arith.extui %12 : vector<256x256xi1> to vector<256x256xi32>
    %14 = arith.sitofp %13 : vector<256x256xi32> to vector<256x256xf32>
    %c0_6 = arith.constant 0 : index
    %c0_7 = arith.constant 0 : index
    %15 = vector.load %arg5[%c0_6, %c0_7] : memref<8x256xf32, #tpu.memory_space<vmem>>, vector<8x256xf32>
    %16 = vector.shape_cast %14 : vector<256x256xf32> to vector<32x8x256xf32>
    %cst_8 = arith.constant dense<0.000000e+00> : vector<8x256xf32>
    %17 = vector.multi_reduction <add>, %16, %cst_8 [0] : vector<32x8x256xf32> to vector<8x256xf32>
    %18 = arith.addf %15, %17 : vector<8x256xf32>
    %c0_9 = arith.constant 0 : index
    %c0_10 = arith.constant 0 : index
    %19 = vector.load %arg5[%c0_9, %c0_10] : memref<8x256xf32, #tpu.memory_space<vmem>>, vector<8x256xf32>
    tpu.vector_store %arg5[%c0_9, %c0_10], %18 {strides = array<i32>} : memref<8x256xf32, #tpu.memory_space<vmem>>, vector<8x256xf32>,
    %c0_i32_11 = arith.constant 0 : i32
    %20 = arith.cmpi eq, %arg1, %c0_i32_11 : i32
    %21 = arith.extui %20 : i1 to i32
    %c0_i32_12 = arith.constant 0 : i32
    %22 = arith.cmpi ne, %21, %c0_i32_12 : i32
    scf.if %22 {
      %c0_13 = arith.constant 0 : index
      %c0_14 = arith.constant 0 : index
      %23 = vector.load %arg5[%c0_13, %c0_14] : memref<8x256xf32, #tpu.memory_space<vmem>>, vector<8x256xf32>
      %cst_15 = arith.constant dense<0.000000e+00> : vector<256xf32>
      %24 = vector.multi_reduction <add>, %23, %cst_15 [0] : vector<8x256xf32> to vector<256xf32>
      %25 = vector.shape_cast %24 : vector<256xf32> to vector<1x256xf32>
      %c0_16 = arith.constant 0 : index
      %c0_17 = arith.constant 0 : index
      %c0_18 = arith.constant 0 : index
      %26 = vector.load %arg4[%c0_16, %c0_17, %c0_18] : memref<1x1x256xf32, #tpu.memory_space<vmem>>, vector<1x1x256xf32>
      %27 = vector.shape_cast %26 : vector<1x1x256xf32> to vector<1x256xf32>
      %28 = vector.shape_cast %25 : vector<1x256xf32> to vector<1x1x256xf32>
      tpu.vector_store %arg4[%c0_16, %c0_17, %c0_18], %28 {strides = array<i32>} : memref<1x1x256xf32, #tpu.memory_space<vmem>>, vector<1x1x256xf32>,
    } else {
    }
    return
  }
  func.func @transform_0(%arg0: i32, %arg1: i32) -> (i32, i32, i32) {
    %c0_i32 = arith.constant 0 : i32
    %c0_i32_0 = arith.constant 0 : i32
    %c0_i32_1 = arith.constant 0 : i32
    return %arg0, %c0_i32, %c0_i32_0 : i32, i32, i32
  }
  func.func @transform_1(%arg0: i32, %arg1: i32) -> (i32, i32, i32) {
    %c0_i32 = arith.constant 0 : i32
    %c0_i32_0 = arith.constant 0 : i32
    %c0_i32_1 = arith.constant 0 : i32
    return %arg0, %c0_i32, %c0_i32_0 : i32, i32, i32
  }
  func.func @transform_2(%arg0: i32, %arg1: i32) -> (i32, i32, i32) {
    %c0_i32 = arith.constant 0 : i32
    %c0_i32_0 = arith.constant 0 : i32
    %c0_i32_1 = arith.constant 0 : i32
    return %arg0, %c0_i32, %c0_i32_0 : i32, i32, i32
  }
}

</mosaic_0001>

<llo_original>
// kernel: tpu_custom_call.1
$region0: #{tpu_custom_call.1}
  #allocation0 [shape = 'u32[]', space=smem, size = 0x4, offset = 0x4, fixed_abs, tag = 'smem constant byte address 0x4 - core index']
  #allocation1 [shape = 'u32[144,128]{1,0:T(1,128)}', space=vmem, size = 0x12000, scoped, tag = 'internal scratch']
  #allocation2 [shape = 'f32[8,256]{1,0:T(8,128)}', space=vmem, size = 0x2000, scoped, tag = 'scratch operand']
  %s0 = inlined_call_operand.hbm [shape: f32[2,8,256], index: 0, kind: input, shape index: {}]
  %s1 = inlined_call_operand.hbm [shape: f32[2,8,256], index: 1, kind: input, shape index: {}]
  %s2 = inlined_call_operand.hbm [shape: f32[2,1,256], index: 2, kind: output, shape index: {}]
  %s3 = sld [smem:[#allocation0]]
  $region57: #{tpu_custom_call.1} parent=0
    _
  %s5 = ssub.s32 1, %s3
  %s6 = scalar_select 0, %s5, %s3
  $region1: #{tpu_custom_call.1} parent=0
    #allocation3 [shape = 'u8[16384]{0}', space=vmem, size = 0x4000, scoped, tag = 'input window, operand 0']
    #allocation4 [shape = 's32[2]{0}', space=sflag, size = 0x8, scoped, tag = 'scoped memory for tpu_custom_call.1']
    #allocation5 [shape = 's32[2]{0}', space=sflag, size = 0x8, scoped, tag = 'scoped memory for tpu_custom_call.1']
    #allocation6 [shape = 'u8[16384]{0}', space=vmem, size = 0x4000, scoped, tag = 'input window, operand 1']
    #allocation7 [shape = 's32[2]{0}', space=sflag, size = 0x8, scoped, tag = 'scoped memory for tpu_custom_call.1']
    #allocation8 [shape = 'u8[2048]{0}', space=vmem, size = 0x800, scoped, tag = 'output window, operand 0']
    %7 = vsyncpa [#allocation4], 0
    %s8 = scalar_lea.sflag [#allocation4], 1
    %9 = vsyncpa %s8, 0
    %10 = vsyncpa [#allocation7], 0
    %s11 = scalar_lea.sflag [#allocation7], 1
    %12 = vsyncpa %s11, 0
    %13 = vsyncpa [#allocation5], 0
    %s14 = scalar_lea.sflag [#allocation5], 1
    %15 = vsyncpa %s14, 0
    loop: start=0, step=1, limit=4
    $region2: #{tpu_custom_call.1} parent=1 // loop_pre_header
      _
    $region3: #{tpu_custom_call.1} parent=1 // loop_header
      %s17 = sphi 0, %s21
      %p18 = scmp.ge.s32.totalorder %s17, 4
      %s24 = sphi 0, %s36
      %s25 = sphi 0, %s32
      %s26 = sphi 0, %s24
      %s27 = sphi 0, %s25
      %s28 = sphi 0, %s26
      %s29 = sphi 0, %s27
      %s39 = sphi 0, %s41
      %s42 = sphi 0, %s39
      %s43 = sphi 0, %s42
      %s59 = sphi 0, %s43
      %s65 = sphi 0, %s67
      %s68 = sphi 0, %s65
      %s69 = sphi 0, %s68
      %s85 = sphi 0, %s69
      %s91 = sphi 0, %s93
      %s94 = sphi 0, %s91
      %s95 = sphi 0, %s94
      %s111 = sphi 0, %s95
    $region4: #{tpu_custom_call.1} parent=1 // loop_header_branch
      %20 = sbr.rel (%p18) target = $region8
    $region5: #{tpu_custom_call.1} parent=1 // loop_body
      %s22 = ssub.s32 %s17, 1
      %s23 = ssub.s32 %s17, 2
      %s30 = sadd.s32 1, %s25
      %p31 = scmp.ge.s32.totalorder %s30, 1
      %s32 = scalar_select %p31, 0, %s30
      %s33 = sadd.s32 1, %s24
      %s34 = scalar_select %p31, %s33, %s24
      %p35 = scmp.ge.s32.totalorder %s34, 2
      %s36 = scalar_select %p35, 0, %s34
      %s37 = ssub.s32 %s24, %s36
      %p38 = scmp.eq.s32.totalorder %s37, 0
      %s40 = sadd.s32 %s39, 1
      %s41 = scalar_select %p38, %s39, %s40
      %p44 = pneg %p38
      %p45 = scmp.eq.s32.totalorder %s17, 1
      %p46 = por %p44, %p45
      %p47 = scmp.ne.s32.totalorder %s39, %s42
      %p48 = scmp.eq.s32.totalorder %s17, 0
      %p49 = por %p47, %p48
      %p50 = scmp.ne.s32.totalorder %s39, %s42
      %p51 = scmp.eq.s32.totalorder %s22, 1
      %p52 = por %p50, %p51
      %p53 = scmp.ne.s32.totalorder %s42, %s43
      %p54 = scmp.eq.s32.totalorder %s22, 0
      %p55 = por %p53, %p54
      %p56 = scmp.ne.s32.totalorder %s42, %s43
      %p57 = scmp.eq.s32.totalorder %s23, 1
      %p58 = por %p56, %p57
      %p60 = scmp.ne.s32.totalorder %s43, %s59
      %p61 = scmp.eq.s32.totalorder %s23, 0
      %p62 = por %p60, %p61
      %s63 = ssub.s32 %s24, %s36
      %p64 = scmp.eq.s32.totalorder %s63, 0
      %s66 = sadd.s32 %s65, 1
      %s67 = scalar_select %p64, %s65, %s66
      %p70 = pneg %p64
      %p71 = scmp.eq.s32.totalorder %s17, 1
      %p72 = por %p70, %p71
      %p73 = scmp.ne.s32.totalorder %s65, %s68
      %p74 = scmp.eq.s32.totalorder %s17, 0
      %p75 = por %p73, %p74
      %p76 = scmp.ne.s32.totalorder %s65, %s68
      %p77 = scmp.eq.s32.totalorder %s22, 1
      %p78 = por %p76, %p77
      %p79 = scmp.ne.s32.totalorder %s68, %s69
      %p80 = scmp.eq.s32.totalorder %s22, 0
      %p81 = por %p79, %p80
      %p82 = scmp.ne.s32.totalorder %s68, %s69
      %p83 = scmp.eq.s32.totalorder %s23, 1
      %p84 = por %p82, %p83
      %p86 = scmp.ne.s32.totalorder %s69, %s85
      %p87 = scmp.eq.s32.totalorder %s23, 0
      %p88 = por %p86, %p87
      %s89 = ssub.s32 %s24, %s36
      %p90 = scmp.eq.s32.totalorder %s89, 0
      %s92 = sadd.s32 %s91, 1
      %s93 = scalar_select %p90, %s91, %s92
      %p96 = pneg %p90
      %p97 = scmp.eq.s32.totalorder %s17, 1
      %p98 = por %p96, %p97
      %p99 = scmp.ne.s32.totalorder %s91, %s94
      %p100 = scmp.eq.s32.totalorder %s17, 0
      %p101 = por %p99, %p100
      %p102 = scmp.ne.s32.totalorder %s91, %s94
      %p103 = scmp.eq.s32.totalorder %s22, 1
      %p104 = por %p102, %p103
      %p105 = scmp.ne.s32.totalorder %s94, %s95
      %p106 = scmp.eq.s32.totalorder %s22, 0
      %p107 = por %p105, %p106
      %p108 = scmp.ne.s32.totalorder %s94, %s95
      %p109 = scmp.eq.s32.totalorder %s23, 1
      %p110 = por %p108, %p109
      %p112 = scmp.ne.s32.totalorder %s95, %s111
      %p113 = scmp.eq.s32.totalorder %s23, 0
      %p114 = por %p112, %p113
      %p115 = scmp.le.s32.totalorder 1, %s17
      %p116 = scmp.lt.s32.totalorder %s17, 3
      %p117 = pnand %p115, %p116
      %p118 = pneg %p117
      // Predicated region
      $region9: #{tpu_custom_call.1} parent=5 // pred_check
        _
      $region10: #{tpu_custom_call.1} parent=5 // pred_check_branch
        %120 = sbr.rel (%p117) target = $region12
      $region11: #{tpu_custom_call.1} parent=5 // pred_region
        %s121 = ssub.s32 %s17, 1
      $region12: #{tpu_custom_call.1} parent=5 // pred_fallthru
        _
      %p122 = scmp.lt.s32.totalorder %s17, 2
      // Predicated region
      $region13: #{tpu_custom_call.1} parent=5 // pred_check
        %p123 = pneg %p122
      $region14: #{tpu_custom_call.1} parent=5 // pred_check_branch
        %125 = sbr.rel (%p123) target = $region16
      $region15: #{tpu_custom_call.1} parent=5 // pred_region
        // Predicated region
        $region17: #{tpu_custom_call.1} parent=15 // pred_check
          %p126 = pneg %p49
        $region18: #{tpu_custom_call.1} parent=15 // pred_check_branch
          %128 = sbr.rel (%p126) target = $region20
        $region19: #{tpu_custom_call.1} parent=15 // pred_region
          %s129 = sand.u32 %s39, 1
          %s130 = scalar_lea.sflag [#allocation4], %s129
          %s131 = sand.u32 %s39, 1
          %s132 = smul.addr %s131, 16
          %s133 = scalar_lea.vmem [#allocation3], %s132
          %s135 = ssub.s32 256, 256
          %136 = vsyncadd %s130, %s135
          %s137 = smul.addr %s24, 2
          %s138 = smul.addr %s137, 128
          %s139 = scalar_lea.hbm %s0, %s138
          %s141 = sshll.u32 %s133, 4
          %s142 = int_to_ptr.vmem [resolvable:$true] %s141
          %144 = dma.hbm_to_vmem [thread:$0]  %s139, 256, %s142, %s130
        $region20: #{tpu_custom_call.1} parent=15 // pred_fallthru
          _
        // Predicated region
        $region21: #{tpu_custom_call.1} parent=15 // pred_check
          %p145 = pneg %p75
        $region22: #{tpu_custom_call.1} parent=15 // pred_check_branch
          %147 = sbr.rel (%p145) target = $region24
        $region23: #{tpu_custom_call.1} parent=15 // pred_region
          %s148 = sand.u32 %s65, 1
          %s149 = scalar_lea.sflag [#allocation7], %s148
          %s150 = sand.u32 %s65, 1
          %s151 = smul.addr %s150, 16
          %s152 = scalar_lea.vmem [#allocation6], %s151
          %s154 = ssub.s32 256, 256
          %155 = vsyncadd %s149, %s154
          %s156 = smul.addr %s24, 2
          %s157 = smul.addr %s156, 128
          %s158 = scalar_lea.hbm %s1, %s157
          %s160 = sshll.u32 %s152, 4
          %s161 = int_to_ptr.vmem [resolvable:$true] %s160
          %163 = dma.hbm_to_vmem [thread:$0]  %s158, 256, %s161, %s149
        $region24: #{tpu_custom_call.1} parent=15 // pred_fallthru
          _
      $region16: #{tpu_custom_call.1} parent=5 // pred_fallthru
        _
      %p164 = scmp.le.s32.totalorder 1, %s17
      %p165 = scmp.lt.s32.totalorder %s17, 3
      %p166 = pnand %p164, %p165
      %p167 = pneg %p166
      // Predicated region
      $region25: #{tpu_custom_call.1} parent=5 // pred_check
        _
      $region26: #{tpu_custom_call.1} parent=5 // pred_check_branch
        %169 = sbr.rel (%p166) target = $region28
      $region27: #{tpu_custom_call.1} parent=5 // pred_region
        %s170 = ssub.s32 %s17, 1
        %s171 = sand.u32 %s42, 1
        %s172 = scalar_lea.sflag [#allocation4], %s171
        %s173 = sand.u32 %s42, 1
        %s174 = smul.addr %s173, 16
        %s175 = scalar_lea.vmem [#allocation3], %s174
        // Predicated region
        $region29: #{tpu_custom_call.1} parent=27 // pred_check
          %p176 = pneg %p55
        $region30: #{tpu_custom_call.1} parent=27 // pred_check_branch
          %178 = sbr.rel (%p176) target = $region32
        $region31: #{tpu_custom_call.1} parent=27 // pred_region
          %179 = dma.done %s172, 256
        $region32: #{tpu_custom_call.1} parent=27 // pred_fallthru
          _
        %s180 = sand.u32 %s68, 1
        %s181 = scalar_lea.sflag [#allocation7], %s180
        %s182 = sand.u32 %s68, 1
        %s183 = smul.addr %s182, 16
        %s184 = scalar_lea.vmem [#allocation6], %s183
        // Predicated region
        $region33: #{tpu_custom_call.1} parent=27 // pred_check
          %p185 = pneg %p81
        $region34: #{tpu_custom_call.1} parent=27 // pred_check_branch
          %187 = sbr.rel (%p185) target = $region36
        $region35: #{tpu_custom_call.1} parent=27 // pred_region
          %188 = dma.done %s181, 256
        $region36: #{tpu_custom_call.1} parent=27 // pred_fallthru
          _
        %s189 = sand.u32 %s42, 1
        %s190 = scalar_lea.sflag [#allocation4], %s189
        %s191 = sand.u32 %s42, 1
        %s192 = smul.addr %s191, 16
        %s193 = scalar_lea.vmem [#allocation3], %s192
        %p194 = pneg %p55
        %p195 = pneg %p52
        %s196 = sand.u32 %s68, 1
        %s197 = scalar_lea.sflag [#allocation7], %s196
        %s198 = sand.u32 %s68, 1
        %s199 = smul.addr %s198, 16
        %s200 = scalar_lea.vmem [#allocation6], %s199
        %p201 = pneg %p81
        %p202 = pneg %p78
        %p203 = pneg %p107
        %p204 = pneg %p104
        %s205 = sand.u32 %s94, 1
        %s206 = scalar_lea.sflag [#allocation5], %s205
        %s207 = sand.u32 %s94, 1
        %s208 = smul.addr %s207, 2
        %s209 = scalar_lea.vmem [#allocation8], %s208
        %p210 = scmp.eq.s32.totalorder %s27, 0
        // Predicated region
        $region37: #{tpu_custom_call.1} parent=27 // pred_check
          %p211 = pneg %p210
        $region38: #{tpu_custom_call.1} parent=27 // pred_check_branch
          %213 = sbr.rel (%p211) target = $region40
        $region39: #{tpu_custom_call.1} parent=27 // pred_region
          %214 = vst [vmem:[#allocation2] sm:$0xff] 0.0
          %215 = vst [vmem:[#allocation2 + $0x8] sm:$0xff] 0.0
        $region40: #{tpu_custom_call.1} parent=27 // pred_fallthru
          _
        %s216 = smul.u32 %s27, 256
        %s217 = sshra.s32 %s216, 7
        %s218 = sand.u32 %s216, 127
        %s219 = smul.addr %s217, 8
        %s220 = scalar_lea.vmem %s175, %s219 [#allocation3]
        %v221 = vld [vmem:[%s220] sm:$0xff]
        %v222 = vld [vmem:[%s220 + $0x8] sm:$0xff]
        %v223 = vld [vmem:[%s184] sm:$0xff]
        %v224 = vld [vmem:[%s184 + $0x8] sm:$0xff]
        %225 = vxpose.xlu0.b32.start [1/16] %v221, 128
        %226 = vxpose.xlu0.b32.cont [2/16] 0.0, 128
        %227 = vxpose.xlu0.b32.cont [3/16] 0.0, 128
        %228 = vxpose.xlu0.b32.cont [4/16] 0.0, 128
        %229 = vxpose.xlu0.b32.cont [5/16] 0.0, 128
        %230 = vxpose.xlu0.b32.cont [6/16] 0.0, 128
        %231 = vxpose.xlu0.b32.cont [7/16] 0.0, 128
        %232 = vxpose.xlu0.b32.cont [8/16] 0.0, 128
        %233 = vxpose.xlu0.b32.cont [9/16] 0.0, 128
        %234 = vxpose.xlu0.b32.cont [10/16] 0.0, 128
        %235 = vxpose.xlu0.b32.cont [11/16] 0.0, 128
        %236 = vxpose.xlu0.b32.cont [12/16] 0.0, 128
        %237 = vxpose.xlu0.b32.cont [13/16] 0.0, 128
        %238 = vxpose.xlu0.b32.cont [14/16] 0.0, 128
        %239 = vxpose.xlu0.b32.cont [15/16] 0.0, 128
        %240 = vxpose.xlu0.b32.end [16/16] 0.0, 128
        %v241 = vpop.trf.xlu0
        %v242 = vpop.trf.xlu0
        %v243 = vpop.trf.xlu0
        %v244 = vpop.trf.xlu0
        %v245 = vpop.trf.xlu0
        %v246 = vpop.trf.xlu0
        %v247 = vpop.trf.xlu0
        %v248 = vpop.trf.xlu0
        %v249 = vpop.trf.xlu0
        %v250 = vpop.trf.xlu0
        %v251 = vpop.trf.xlu0
        %v252 = vpop.trf.xlu0
        %v253 = vpop.trf.xlu0
        %v254 = vpop.trf.xlu0
        %v255 = vpop.trf.xlu0
        %v256 = vpop.trf.xlu0
        %257 = vxpose.xlu0.b32.start [1/16] %v222, 128
        %258 = vxpose.xlu0.b32.cont [2/16] 0.0, 128
        %259 = vxpose.xlu0.b32.cont [3/16] 0.0, 128
        %260 = vxpose.xlu0.b32.cont [4/16] 0.0, 128
        %261 = vxpose.xlu0.b32.cont [5/16] 0.0, 128
        %262 = vxpose.xlu0.b32.cont [6/16] 0.0, 128
        %263 = vxpose.xlu0.b32.cont [7/16] 0.0, 128
        %264 = vxpose.xlu0.b32.cont [8/16] 0.0, 128
        %265 = vxpose.xlu0.b32.cont [9/16] 0.0, 128
        %266 = vxpose.xlu0.b32.cont [10/16] 0.0, 128
        %267 = vxpose.xlu0.b32.cont [11/16] 0.0, 128
        %268 = vxpose.xlu0.b32.cont [12/16] 0.0, 128
        %269 = vxpose.xlu0.b32.cont [13/16] 0.0, 128
        %270 = vxpose.xlu0.b32.cont [14/16] 0.0, 128
        %271 = vxpose.xlu0.b32.cont [15/16] 0.0, 128
        %272 = vxpose.xlu0.b32.end [16/16] 0.0, 128
        %v273 = vpop.trf.xlu0
        %v274 = vpop.trf.xlu0
        %v275 = vpop.trf.xlu0
        %v276 = vpop.trf.xlu0
        %v277 = vpop.trf.xlu0
        %v278 = vpop.trf.xlu0
        %v279 = vpop.trf.xlu0
        %v280 = vpop.trf.xlu0
        %v281 = vpop.trf.xlu0
        %v282 = vpop.trf.xlu0
        %v283 = vpop.trf.xlu0
        %v284 = vpop.trf.xlu0
        %v285 = vpop.trf.xlu0
        %v286 = vpop.trf.xlu0
        %v287 = vpop.trf.xlu0
        %v288 = vpop.trf.xlu0
        %vm289 = vcmask 64512
        %v291 = vsel %vm289, %v241, 0
        %v294 = vsel %vm289, %v242, 0
        %v297 = vsel %vm289, %v243, 0
        %v300 = vsel %vm289, %v244, 0
        %v303 = vsel %vm289, %v245, 0
        %v306 = vsel %vm289, %v246, 0
        %v309 = vsel %vm289, %v247, 0
        %v312 = vsel %vm289, %v248, 0
        %v315 = vsel %vm289, %v249, 0
        %v318 = vsel %vm289, %v250, 0
        %v321 = vsel %vm289, %v251, 0
        %v324 = vsel %vm289, %v252, 0
        %v327 = vsel %vm289, %v253, 0
        %v330 = vsel %vm289, %v254, 0
        %v333 = vsel %vm289, %v255, 0
        %v336 = vsel %vm289, %v256, 0
        %v339 = vsel %vm289, %v273, 0
        %v342 = vsel %vm289, %v274, 0
        %v345 = vsel %vm289, %v275, 0
        %v348 = vsel %vm289, %v276, 0
        %v351 = vsel %vm289, %v277, 0
        %v354 = vsel %vm289, %v278, 0
        %v357 = vsel %vm289, %v279, 0
        %v360 = vsel %vm289, %v280, 0
        %v363 = vsel %vm289, %v281, 0
        %v366 = vsel %vm289, %v282, 0
        %v369 = vsel %vm289, %v283, 0
        %v372 = vsel %vm289, %v284, 0
        %v375 = vsel %vm289, %v285, 0
        %v378 = vsel %vm289, %v286, 0
        %v381 = vsel %vm289, %v287, 0
        %v384 = vsel %vm289, %v288, 0
        %386 = vmatprep.subr.mxu0 %v224
        %387 = vmatpush1.msra.mxu0 %v223
        %388 = vmatprep.subr.mxu0 0.0
        %389 = vmatpush1.msra.mxu0 0.0
        %390 = vmatprep.subr.mxu0 0.0
        %391 = vmatpush1.msra.mxu0 0.0
        %392 = vmatprep.subr.mxu0 0.0
        %393 = vmatpush1.msra.mxu0 0.0
        %394 = vmatprep.subr.mxu0 0.0
        %395 = vmatpush1.msra.mxu0 0.0
        %396 = vmatprep.subr.mxu0 0.0
        %397 = vmatpush1.msra.mxu0 0.0
        %398 = vmatprep.subr.mxu0 0.0
        %399 = vmatpush1.msra.mxu0 0.0
        %400 = vmatprep.subr.mxu0 0.0
        %401 = vmatpush1.msra.mxu0 0.0
        %402 = vmatprep.subr.mxu0 0.0
        %403 = vmatpush1.msra.mxu0 0.0
        %404 = vmatprep.subr.mxu0 0.0
        %405 = vmatpush1.msra.mxu0 0.0
        %406 = vmatprep.subr.mxu0 0.0
        %407 = vmatpush1.msra.mxu0 0.0
        %408 = vmatprep.subr.mxu0 0.0
        %409 = vmatpush1.msra.mxu0 0.0
        %410 = vmatprep.subr.mxu0 0.0
        %411 = vmatpush1.msra.mxu0 0.0
        %412 = vmatprep.subr.mxu0 0.0
        %413 = vmatpush1.msra.mxu0 0.0
        %414 = vmatprep.subr.mxu0 0.0
        %415 = vmatpush1.msra.mxu0 0.0
        %416 = vmatprep.subr.mxu0 0.0
        %417 = vmatpush1.msra.mxu0 0.0
        %418 = vmatprep.subr.mxu0 0.0
        %419 = vmatpush1.msra.mxu0 0.0
        %420 = vmatprep.subr.mxu0 0.0
        %421 = vmatpush1.msra.mxu0 0.0
        %422 = vmatprep.subr.mxu0 0.0
        %423 = vmatpush1.msra.mxu0 0.0
        %424 = vmatprep.subr.mxu0 0.0
        %425 = vmatpush1.msra.mxu0 0.0
        %426 = vmatprep.subr.mxu0 0.0
        %427 = vmatpush1.msra.mxu0 0.0
        %428 = vmatprep.subr.mxu0 0.0
        %429 = vmatpush1.msra.mxu0 0.0
        %430 = vmatprep.subr.mxu0 0.0
        %431 = vmatpush1.msra.mxu0 0.0
        %432 = vmatprep.subr.mxu0 0.0
        %433 = vmatpush1.msra.mxu0 0.0
        %434 = vmatprep.subr.mxu0 0.0
        %435 = vmatpush1.msra.mxu0 0.0
        %436 = vmatprep.subr.mxu0 0.0
        %437 = vmatpush1.msra.mxu0 0.0
        %438 = vmatprep.subr.mxu0 0.0
        %439 = vmatpush1.msra.mxu0 0.0
        %440 = vmatprep.subr.mxu0 0.0
        %441 = vmatpush1.msra.mxu0 0.0
        %442 = vmatprep.subr.mxu0 0.0
        %443 = vmatpush1.msra.mxu0 0.0
        %444 = vmatprep.subr.mxu0 0.0
        %445 = vmatpush1.msra.mxu0 0.0
        %446 = vmatprep.subr.mxu0 0.0
        %447 = vmatpush1.msra.mxu0 0.0
        %448 = vmatprep.subr.mxu0 0.0
        %449 = vmatpush1.msra.mxu0 0.0
        %450 = vmatprep.mubr.f32.mxu0 0.0
        %451 = vmatmul.mubr.f32.gmra.mrb[0].mxu0 %v291
        %v452 = vpop.f32.mrb[0].mxu0
        %v453 = vadd.f32 0.0, %v452
        %v454 = vpop.f32.mrb[0].mxu0
        %v455 = vadd.f32 0.0, %v454
        %456 = vmatprep.mubr.f32.mxu0 0.0
        %457 = vmatmul.mubr.f32.gmra.mrb[0].mxu0 %v294
        %v458 = vpop.f32.mrb[0].mxu0
        %v459 = vadd.f32 0.0, %v458
        %v460 = vpop.f32.mrb[0].mxu0
        %v461 = vadd.f32 0.0, %v460
        %462 = vmatprep.mubr.f32.mxu0 0.0
        %463 = vmatmul.mubr.f32.gmra.mrb[0].mxu0 %v297
        %v464 = vpop.f32.mrb[0].mxu0
        %v465 = vadd.f32 0.0, %v464
        %v466 = vpop.f32.mrb[0].mxu0
        %v467 = vadd.f32 0.0, %v466
        %468 = vmatprep.mubr.f32.mxu0 0.0
        %469 = vmatmul.mubr.f32.gmra.mrb[0].mxu0 %v300
        %v470 = vpop.f32.mrb[0].mxu0
        %v471 = vadd.f32 0.0, %v470
        %v472 = vpop.f32.mrb[0].mxu0
        %v473 = vadd.f32 0.0, %v472
        %474 = vmatprep.mubr.f32.mxu0 0.0
        %475 = vmatmul.mubr.f32.gmra.mrb[0].mxu0 %v303
        %v476 = vpop.f32.mrb[0].mxu0
        %v477 = vadd.f32 0.0, %v476
        %v478 = vpop.f32.mrb[0].mxu0
        %v479 = vadd.f32 0.0, %v478
        %480 = vmatprep.mubr.f32.mxu0 0.0
        %481 = vmatmul.mubr.f32.gmra.mrb[0].mxu0 %v306
        %v482 = vpop.f32.mrb[0].mxu0
        %v483 = vadd.f32 0.0, %v482
        %v484 = vpop.f32.mrb[0].mxu0
        %v485 = vadd.f32 0.0, %v484
        %486 = vmatprep.mubr.f32.mxu0 0.0
        %487 = vmatmul.mubr.f32.gmra.mrb[0].mxu0 %v309
        %v488 = vpop.f32.mrb[0].mxu0
        %v489 = vadd.f32 0.0, %v488
        %v490 = vpop.f32.mrb[0].mxu0
        %v491 = vadd.f32 0.0, %v490
        %492 = vmatprep.mubr.f32.mxu0 0.0
        %493 = vmatmul.mubr.f32.gmra.mrb[0].mxu0 %v312
        %v494 = vpop.f32.mrb[0].mxu0
        %v495 = vadd.f32 0.0, %v494
        %v496 = vpop.f32.mrb[0].mxu0
        %v497 = vadd.f32 0.0, %v496
        %498 = vmatprep.mubr.f32.mxu0 0.0
        %499 = vmatmul.mubr.f32.gmra.mrb[0].mxu0 %v315
        %v500 = vpop.f32.mrb[0].mxu0
        %v501 = vadd.f32 0.0, %v500
        %v502 = vpop.f32.mrb[0].mxu0
        %v503 = vadd.f32 0.0, %v502
        %504 = vmatprep.mubr.f32.mxu0 0.0
        %505 = vmatmul.mubr.f32.gmra.mrb[0].mxu0 %v318
        %v506 = vpop.f32.mrb[0].mxu0
        %v507 = vadd.f32 0.0, %v506
        %v508 = vpop.f32.mrb[0].mxu0
        %v509 = vadd.f32 0.0, %v508
        %510 = vmatprep.mubr.f32.mxu0 0.0
        %511 = vmatmul.mubr.f32.gmra.mrb[0].mxu0 %v321
        %v512 = vpop.f32.mrb[0].mxu0
        %v513 = vadd.f32 0.0, %v512
        %v514 = vpop.f32.mrb[0].mxu0
        %v515 = vadd.f32 0.0, %v514
        %516 = vmatprep.mubr.f32.mxu0 0.0
        %517 = vmatmul.mubr.f32.gmra.mrb[0].mxu0 %v324
        %v518 = vpop.f32.mrb[0].mxu0
        %v519 = vadd.f32 0.0, %v518
        %v520 = vpop.f32.mrb[0].mxu0
        %v521 = vadd.f32 0.0, %v520
        %522 = vmatprep.mubr.f32.mxu0 0.0
        %523 = vmatmul.mubr.f32.gmra.mrb[0].mxu0 %v327
        %v524 = vpop.f32.mrb[0].mxu0
        %v525 = vadd.f32 0.0, %v524
        %v526 = vpop.f32.mrb[0].mxu0
        %v527 = vadd.f32 0.0, %v526
        %528 = vmatprep.mubr.f32.mxu0 0.0
        %529 = vmatmul.mubr.f32.gmra.mrb[0].mxu0 %v330
        %v530 = vpop.f32.mrb[0].mxu0
        %v531 = vadd.f32 0.0, %v530
        %v532 = vpop.f32.mrb[0].mxu0
        %v533 = vadd.f32 0.0, %v532
        %534 = vmatprep.mubr.f32.mxu0 0.0
        %535 = vmatmul.mubr.f32.gmra.mrb[0].mxu0 %v333
        %v536 = vpop.f32.mrb[0].mxu0
        %v537 = vadd.f32 0.0, %v536
        %v538 = vpop.f32.mrb[0].mxu0
        %v539 = vadd.f32 0.0, %v538
        %540 = vmatprep.mubr.f32.mxu0 0.0
        %541 = vmatmul.mubr.f32.gmra.mrb[0].mxu0 %v336
        %v542 = vpop.f32.mrb[0].mxu0
        %v543 = vadd.f32 0.0, %v542
        %v544 = vpop.f32.mrb[0].mxu0
        %v545 = vadd.f32 0.0, %v544
        %546 = vmatprep.mubr.f32.mxu0 0.0
        %547 = vmatmul.mubr.f32.gmra.mrb[0].mxu0 %v339
        %v548 = vpop.f32.mrb[0].mxu0
        %v549 = vadd.f32 0.0, %v548
        %v550 = vpop.f32.mrb[0].mxu0
        %v551 = vadd.f32 0.0, %v550
        %552 = vmatprep.mubr.f32.mxu0 0.0
        %553 = vmatmul.mubr.f32.gmra.mrb[0].mxu0 %v342
        %v554 = vpop.f32.mrb[0].mxu0
        %v555 = vadd.f32 0.0, %v554
        %v556 = vpop.f32.mrb[0].mxu0
        %v557 = vadd.f32 0.0, %v556
        %558 = vmatprep.mubr.f32.mxu0 0.0
        %559 = vmatmul.mubr.f32.gmra.mrb[0].mxu0 %v345
        %v560 = vpop.f32.mrb[0].mxu0
        %v561 = vadd.f32 0.0, %v560
        %v562 = vpop.f32.mrb[0].mxu0
        %v563 = vadd.f32 0.0, %v562
        %564 = vmatprep.mubr.f32.mxu0 0.0
        %565 = vmatmul.mubr.f32.gmra.mrb[0].mxu0 %v348
        %v566 = vpop.f32.mrb[0].mxu0
        %v567 = vadd.f32 0.0, %v566
        %v568 = vpop.f32.mrb[0].mxu0
        %v569 = vadd.f32 0.0, %v568
        %570 = vmatprep.mubr.f32.mxu0 0.0
        %571 = vmatmul.mubr.f32.gmra.mrb[0].mxu0 %v351
        %v572 = vpop.f32.mrb[0].mxu0
        %v573 = vadd.f32 0.0, %v572
        %v574 = vpop.f32.mrb[0].mxu0
        %v575 = vadd.f32 0.0, %v574
        %576 = vmatprep.mubr.f32.mxu0 0.0
        %577 = vmatmul.mubr.f32.gmra.mrb[0].mxu0 %v354
        %v578 = vpop.f32.mrb[0].mxu0
        %v579 = vadd.f32 0.0, %v578
        %v580 = vpop.f32.mrb[0].mxu0
        %v581 = vadd.f32 0.0, %v580
        %582 = vmatprep.mubr.f32.mxu0 0.0
        %583 = vmatmul.mubr.f32.gmra.mrb[0].mxu0 %v357
        %v584 = vpop.f32.mrb[0].mxu0
        %v585 = vadd.f32 0.0, %v584
        %v586 = vpop.f32.mrb[0].mxu0
        %v587 = vadd.f32 0.0, %v586
        %588 = vmatprep.mubr.f32.mxu0 0.0
        %589 = vmatmul.mubr.f32.gmra.mrb[0].mxu0 %v360
        %v590 = vpop.f32.mrb[0].mxu0
        %v591 = vadd.f32 0.0, %v590
        %v592 = vpop.f32.mrb[0].mxu0
        %v593 = vadd.f32 0.0, %v592
        %594 = vmatprep.mubr.f32.mxu0 0.0
        %595 = vmatmul.mubr.f32.gmra.mrb[0].mxu0 %v363
        %v596 = vpop.f32.mrb[0].mxu0
        %v597 = vadd.f32 0.0, %v596
        %v598 = vpop.f32.mrb[0].mxu0
        %v599 = vadd.f32 0.0, %v598
        %600 = vmatprep.mubr.f32.mxu0 0.0
        %601 = vmatmul.mubr.f32.gmra.mrb[0].mxu0 %v366
        %v602 = vpop.f32.mrb[0].mxu0
        %v603 = vadd.f32 0.0, %v602
        %v604 = vpop.f32.mrb[0].mxu0
        %v605 = vadd.f32 0.0, %v604
        %606 = vmatprep.mubr.f32.mxu0 0.0
        %607 = vmatmul.mubr.f32.gmra.mrb[0].mxu0 %v369
        %v608 = vpop.f32.mrb[0].mxu0
        %v609 = vadd.f32 0.0, %v608
        %v610 = vpop.f32.mrb[0].mxu0
        %v611 = vadd.f32 0.0, %v610
        %612 = vmatprep.mubr.f32.mxu0 0.0
        %613 = vmatmul.mubr.f32.gmra.mrb[0].mxu0 %v372
        %v614 = vpop.f32.mrb[0].mxu0
        %v615 = vadd.f32 0.0, %v614
        %v616 = vpop.f32.mrb[0].mxu0
        %v617 = vadd.f32 0.0, %v616
        %618 = vmatprep.mubr.f32.mxu0 0.0
        %619 = vmatmul.mubr.f32.gmra.mrb[0].mxu0 %v375
        %v620 = vpop.f32.mrb[0].mxu0
        %v621 = vadd.f32 0.0, %v620
        %v622 = vpop.f32.mrb[0].mxu0
        %v623 = vadd.f32 0.0, %v622
        %624 = vmatprep.mubr.f32.mxu0 0.0
        %625 = vmatmul.mubr.f32.gmra.mrb[0].mxu0 %v378
        %v626 = vpop.f32.mrb[0].mxu0
        %v627 = vadd.f32 0.0, %v626
        %v628 = vpop.f32.mrb[0].mxu0
        %v629 = vadd.f32 0.0, %v628
        %630 = vmatprep.mubr.f32.mxu0 0.0
        %631 = vmatmul.mubr.f32.gmra.mrb[0].mxu0 %v381
        %v632 = vpop.f32.mrb[0].mxu0
        %v633 = vadd.f32 0.0, %v632
        %v634 = vpop.f32.mrb[0].mxu0
        %v635 = vadd.f32 0.0, %v634
        %636 = vmatprep.mubr.f32.mxu0 0.0
        %637 = vmatmul.mubr.f32.gmra.mrb[0].mxu0 %v384
        %v638 = vpop.f32.mrb[0].mxu0
        %v639 = vadd.f32 0.0, %v638
        %v640 = vpop.f32.mrb[0].mxu0
        %v641 = vadd.f32 0.0, %v640
        %642 = vdwg.mxu0
        %vm643 = vcmp.le.f32.partialorder %v453, 0.0
        %vm644 = vcmp.le.f32.partialorder %v455, 0.0
        %vm645 = vcmp.le.f32.partialorder %v459, 0.0
        %vm646 = vcmp.le.f32.partialorder %v461, 0.0
        %vm647 = vcmp.le.f32.partialorder %v465, 0.0
        %vm648 = vcmp.le.f32.partialorder %v467, 0.0
        %vm649 = vcmp.le.f32.partialorder %v471, 0.0
        %vm650 = vcmp.le.f32.partialorder %v473, 0.0
        %vm651 = vcmp.le.f32.partialorder %v477, 0.0
        %vm652 = vcmp.le.f32.partialorder %v479, 0.0
        %vm653 = vcmp.le.f32.partialorder %v483, 0.0
        %vm654 = vcmp.le.f32.partialorder %v485, 0.0
        %vm655 = vcmp.le.f32.partialorder %v489, 0.0
        %vm656 = vcmp.le.f32.partialorder %v491, 0.0
        %vm657 = vcmp.le.f32.partialorder %v495, 0.0
        %vm658 = vcmp.le.f32.partialorder %v497, 0.0
        %vm659 = vcmp.le.f32.partialorder %v501, 0.0
        %vm660 = vcmp.le.f32.partialorder %v503, 0.0
        %vm661 = vcmp.le.f32.partialorder %v507, 0.0
        %vm662 = vcmp.le.f32.partialorder %v509, 0.0
        %vm663 = vcmp.le.f32.partialorder %v513, 0.0
        %vm664 = vcmp.le.f32.partialorder %v515, 0.0
        %vm665 = vcmp.le.f32.partialorder %v519, 0.0
        %vm666 = vcmp.le.f32.partialorder %v521, 0.0
        %vm667 = vcmp.le.f32.partialorder %v525, 0.0
        %vm668 = vcmp.le.f32.partialorder %v527, 0.0
        %vm669 = vcmp.le.f32.partialorder %v531, 0.0
        %vm670 = vcmp.le.f32.partialorder %v533, 0.0
        %vm671 = vcmp.le.f32.partialorder %v537, 0.0
        %vm672 = vcmp.le.f32.partialorder %v539, 0.0
        %vm673 = vcmp.le.f32.partialorder %v543, 0.0
        %vm674 = vcmp.le.f32.partialorder %v545, 0.0
        %vm675 = vcmp.le.f32.partialorder %v549, 0.0
        %vm676 = vcmp.le.f32.partialorder %v551, 0.0
        %vm677 = vcmp.le.f32.partialorder %v555, 0.0
        %vm678 = vcmp.le.f32.partialorder %v557, 0.0
        %vm679 = vcmp.le.f32.partialorder %v561, 0.0
        %vm680 = vcmp.le.f32.partialorder %v563, 0.0
        %vm681 = vcmp.le.f32.partialorder %v567, 0.0
        %vm682 = vcmp.le.f32.partialorder %v569, 0.0
        %vm683 = vcmp.le.f32.partialorder %v573, 0.0
        %vm684 = vcmp.le.f32.partialorder %v575, 0.0
        %vm685 = vcmp.le.f32.partialorder %v579, 0.0
        %vm686 = vcmp.le.f32.partialorder %v581, 0.0
        %vm687 = vcmp.le.f32.partialorder %v585, 0.0
        %vm688 = vcmp.le.f32.partialorder %v587, 0.0
        %vm689 = vcmp.le.f32.partialorder %v591, 0.0
        %vm690 = vcmp.le.f32.partialorder %v593, 0.0
        %vm691 = vcmp.le.f32.partialorder %v597, 0.0
        %vm692 = vcmp.le.f32.partialorder %v599, 0.0
        %vm693 = vcmp.le.f32.partialorder %v603, 0.0
        %vm694 = vcmp.le.f32.partialorder %v605, 0.0
        %vm695 = vcmp.le.f32.partialorder %v609, 0.0
        %vm696 = vcmp.le.f32.partialorder %v611, 0.0
        %vm697 = vcmp.le.f32.partialorder %v615, 0.0
        %vm698 = vcmp.le.f32.partialorder %v617, 0.0
        %vm699 = vcmp.le.f32.partialorder %v621, 0.0
        %vm700 = vcmp.le.f32.partialorder %v623, 0.0
        %vm701 = vcmp.le.f32.partialorder %v627, 0.0
        %vm702 = vcmp.le.f32.partialorder %v629, 0.0
        %vm703 = vcmp.le.f32.partialorder %v633, 0.0
        %vm704 = vcmp.le.f32.partialorder %v635, 0.0
        %vm705 = vcmp.le.f32.partialorder %v639, 0.0
        %vm706 = vcmp.le.f32.partialorder %v641, 0.0
        %v707 = vsel %vm643, 1, 0
        %v708 = vsel %vm644, 1, 0
        %v709 = vsel %vm645, 1, 0
        %v710 = vsel %vm646, 1, 0
        %v711 = vsel %vm647, 1, 0
        %v712 = vsel %vm648, 1, 0
        %v713 = vsel %vm649, 1, 0
        %v714 = vsel %vm650, 1, 0
        %v715 = vsel %vm651, 1, 0
        %v716 = vsel %vm652, 1, 0
        %v717 = vsel %vm653, 1, 0
        %v718 = vsel %vm654, 1, 0
        %v719 = vsel %vm655, 1, 0
        %v720 = vsel %vm656, 1, 0
        %v721 = vsel %vm657, 1, 0
        %v722 = vsel %vm658, 1, 0
        %v723 = vsel %vm659, 1, 0
        %v724 = vsel %vm660, 1, 0
        %v725 = vsel %vm661, 1, 0
        %v726 = vsel %vm662, 1, 0
        %v727 = vsel %vm663, 1, 0
        %v728 = vsel %vm664, 1, 0
        %v729 = vsel %vm665, 1, 0
        %v730 = vsel %vm666, 1, 0
        %v731 = vsel %vm667, 1, 0
        %v732 = vsel %vm668, 1, 0
        %v733 = vsel %vm669, 1, 0
        %v734 = vsel %vm670, 1, 0
        %v735 = vsel %vm671, 1, 0
        %v736 = vsel %vm672, 1, 0
        %v737 = vsel %vm673, 1, 0
        %v738 = vsel %vm674, 1, 0
        %v739 = vsel %vm675, 1, 0
        %v740 = vsel %vm676, 1, 0
        %v741 = vsel %vm677, 1, 0
        %v742 = vsel %vm678, 1, 0
        %v743 = vsel %vm679, 1, 0
        %v744 = vsel %vm680, 1, 0
        %v745 = vsel %vm681, 1, 0
        %v746 = vsel %vm682, 1, 0
        %v747 = vsel %vm683, 1, 0
        %v748 = vsel %vm684, 1, 0
        %v749 = vsel %vm685, 1, 0
        %v750 = vsel %vm686, 1, 0
        %v751 = vsel %vm687, 1, 0
        %v752 = vsel %vm688, 1, 0
        %v753 = vsel %vm689, 1, 0
        %v754 = vsel %vm690, 1, 0
        %v755 = vsel %vm691, 1, 0
        %v756 = vsel %vm692, 1, 0
        %v757 = vsel %vm693, 1, 0
        %v758 = vsel %vm694, 1, 0
        %v759 = vsel %vm695, 1, 0
        %v760 = vsel %vm696, 1, 0
        %v761 = vsel %vm697, 1, 0
        %v762 = vsel %vm698, 1, 0
        %v763 = vsel %vm699, 1, 0
        %v764 = vsel %vm700, 1, 0
        %v765 = vsel %vm701, 1, 0
        %v766 = vsel %vm702, 1, 0
        %v767 = vsel %vm703, 1, 0
        %v768 = vsel %vm704, 1, 0
        %v769 = vsel %vm705, 1, 0
        %v770 = vsel %vm706, 1, 0
        %v771 = vcvt.s32.f32 %v707
        %v772 = vcvt.s32.f32 %v708
        %v773 = vcvt.s32.f32 %v709
        %v774 = vcvt.s32.f32 %v710
        %v775 = vcvt.s32.f32 %v711
        %v776 = vcvt.s32.f32 %v712
        %v777 = vcvt.s32.f32 %v713
        %v778 = vcvt.s32.f32 %v714
        %v779 = vcvt.s32.f32 %v715
        %v780 = vcvt.s32.f32 %v716
        %v781 = vcvt.s32.f32 %v717
        %v782 = vcvt.s32.f32 %v718
        %v783 = vcvt.s32.f32 %v719
        %v784 = vcvt.s32.f32 %v720
        %v785 = vcvt.s32.f32 %v721
        %v786 = vcvt.s32.f32 %v722
        %v787 = vcvt.s32.f32 %v723
        %v788 = vcvt.s32.f32 %v724
        %v789 = vcvt.s32.f32 %v725
        %v790 = vcvt.s32.f32 %v726
        %v791 = vcvt.s32.f32 %v727
        %v792 = vcvt.s32.f32 %v728
        %v793 = vcvt.s32.f32 %v729
        %v794 = vcvt.s32.f32 %v730
        %v795 = vcvt.s32.f32 %v731
        %v796 = vcvt.s32.f32 %v732
        %v797 = vcvt.s32.f32 %v733
        %v798 = vcvt.s32.f32 %v734
        %v799 = vcvt.s32.f32 %v735
        %v800 = vcvt.s32.f32 %v736
        %v801 = vcvt.s32.f32 %v737
        %v802 = vcvt.s32.f32 %v738
        %v803 = vcvt.s32.f32 %v739
        %v804 = vcvt.s32.f32 %v740
        %v805 = vcvt.s32.f32 %v741
        %v806 = vcvt.s32.f32 %v742
        %v807 = vcvt.s32.f32 %v743
        %v808 = vcvt.s32.f32 %v744
        %v809 = vcvt.s32.f32 %v745
        %v810 = vcvt.s32.f32 %v746
        %v811 = vcvt.s32.f32 %v747
        %v812 = vcvt.s32.f32 %v748
        %v813 = vcvt.s32.f32 %v749
        %v814 = vcvt.s32.f32 %v750
        %v815 = vcvt.s32.f32 %v751
        %v816 = vcvt.s32.f32 %v752
        %v817 = vcvt.s32.f32 %v753
        %v818 = vcvt.s32.f32 %v754
        %v819 = vcvt.s32.f32 %v755
        %v820 = vcvt.s32.f32 %v756
        %v821 = vcvt.s32.f32 %v757
        %v822 = vcvt.s32.f32 %v758
        %v823 = vcvt.s32.f32 %v759
        %v824 = vcvt.s32.f32 %v760
        %v825 = vcvt.s32.f32 %v761
        %v826 = vcvt.s32.f32 %v762
        %v827 = vcvt.s32.f32 %v763
        %v828 = vcvt.s32.f32 %v764
        %v829 = vcvt.s32.f32 %v765
        %v830 = vcvt.s32.f32 %v766
        %v831 = vcvt.s32.f32 %v767
        %v832 = vcvt.s32.f32 %v768
        %v833 = vcvt.s32.f32 %v769
        %v834 = vcvt.s32.f32 %v770
        %v835 = vld [vmem:[#allocation2] sm:$0xff]
        %v836 = vld [vmem:[#allocation2 + $0x8] sm:$0xff]
        %v837 = vadd.f32 %v771, %v773
        %v838 = vadd.f32 %v837, %v775
        %v839 = vadd.f32 %v838, %v777
        %v840 = vadd.f32 %v839, %v779
        %v841 = vadd.f32 %v840, %v781
        %v842 = vadd.f32 %v841, %v783
        %v843 = vadd.f32 %v842, %v785
        %v844 = vadd.f32 %v843, %v787
        %v845 = vadd.f32 %v844, %v789
        %v846 = vadd.f32 %v845, %v791
        %v847 = vadd.f32 %v846, %v793
        %v848 = vadd.f32 %v847, %v795
        %v849 = vadd.f32 %v848, %v797
        %v850 = vadd.f32 %v849, %v799
        %v851 = vadd.f32 %v850, %v801
        %v852 = vadd.f32 %v851, %v803
        %v853 = vadd.f32 %v852, %v805
        %v854 = vadd.f32 %v853, %v807
        %v855 = vadd.f32 %v854, %v809
        %v856 = vadd.f32 %v855, %v811
        %v857 = vadd.f32 %v856, %v813
        %v858 = vadd.f32 %v857, %v815
        %v859 = vadd.f32 %v858, %v817
        %v860 = vadd.f32 %v859, %v819
        %v861 = vadd.f32 %v860, %v821
        %v862 = vadd.f32 %v861, %v823
        %v863 = vadd.f32 %v862, %v825
        %v864 = vadd.f32 %v863, %v827
        %v865 = vadd.f32 %v864, %v829
        %v866 = vadd.f32 %v865, %v831
        %v867 = vadd.f32 %v866, %v833
        %v868 = vadd.f32 %v772, %v774
        %v869 = vadd.f32 %v868, %v776
        %v870 = vadd.f32 %v869, %v778
        %v871 = vadd.f32 %v870, %v780
        %v872 = vadd.f32 %v871, %v782
        %v873 = vadd.f32 %v872, %v784
        %v874 = vadd.f32 %v873, %v786
        %v875 = vadd.f32 %v874, %v788
        %v876 = vadd.f32 %v875, %v790
        %v877 = vadd.f32 %v876, %v792
        %v878 = vadd.f32 %v877, %v794
        %v879 = vadd.f32 %v878, %v796
        %v880 = vadd.f32 %v879, %v798
        %v881 = vadd.f32 %v880, %v800
        %v882 = vadd.f32 %v881, %v802
        %v883 = vadd.f32 %v882, %v804
        %v884 = vadd.f32 %v883, %v806
        %v885 = vadd.f32 %v884, %v808
        %v886 = vadd.f32 %v885, %v810
        %v887 = vadd.f32 %v886, %v812
        %v888 = vadd.f32 %v887, %v814
        %v889 = vadd.f32 %v888, %v816
        %v890 = vadd.f32 %v889, %v818
        %v891 = vadd.f32 %v890, %v820
        %v892 = vadd.f32 %v891, %v822
        %v893 = vadd.f32 %v892, %v824
        %v894 = vadd.f32 %v893, %v826
        %v895 = vadd.f32 %v894, %v828
        %v896 = vadd.f32 %v895, %v830
        %v897 = vadd.f32 %v896, %v832
        %v898 = vadd.f32 %v897, %v834
        %v899 = vadd.f32 %v835, %v867
        %v900 = vadd.f32 %v836, %v898
        %901 = vst [vmem:[#allocation2] sm:$0xff] %v899
        %902 = vst [vmem:[#allocation2 + $0x8] sm:$0xff] %v900
        // Predicated region
        $region41: #{tpu_custom_call.1} parent=27 // pred_check
          %p903 = pneg %p210
        $region42: #{tpu_custom_call.1} parent=27 // pred_check_branch
          %905 = sbr.rel (%p903) target = $region44
        $region43: #{tpu_custom_call.1} parent=27 // pred_region
          %v906 = vld [vmem:[#allocation2] sm:$0xff]
          %v907 = vld [vmem:[#allocation2 + $0x8] sm:$0xff]
          %v908 = vrot.slane %v906, 4
          %v909 = vadd.f32 %v906, %v908
          %v910 = vrot.slane %v909, 2
          %v911 = vadd.f32 %v909, %v910
          %v912 = vrot.slane %v911, 1
          %v913 = vadd.f32 %v911, %v912
          %v914 = vrot.slane %v907, 4
          %v915 = vadd.f32 %v907, %v914
          %v916 = vrot.slane %v915, 2
          %v917 = vadd.f32 %v915, %v916
          %v918 = vrot.slane %v917, 1
          %v919 = vadd.f32 %v917, %v918
          %v922 = vcombine.low %v913, %v919
          %v924 = vunpack.c.l.s4 1966171168
          %v925 = vunpack.c.0.s8 %v924
          %v926 = vlaneseq
          %v927 = vshrl.u32 %v926, 7
          %v928 = vsub.s32 %v925, %v927
          %v929 = vrot.slane %v922, %v928
          %v931 = vunpack.c.l.s4 1966171168
          %v932 = vunpack.c.0.s8 %v931
          %v933 = vlaneseq
          %v934 = vshrl.u32 %v933, 7
          %v935 = vsub.s32 %v932, %v934
          %v936 = vrot.slane %v929, %v935
          %v938 = vlaneseq
          %vm939 = vcmp.ge.s32.totalorder %v938, 0
          %vm940 = vcmp.lt.s32.totalorder %v938, 256
          %vm941 = vmand %vm939, %vm940
          %942 = vst.msk [vmem:[%s209] sm:$0x3] %vm941, %v936
        $region44: #{tpu_custom_call.1} parent=27 // pred_fallthru
          _
        %s943 = sand.u32 %s94, 1
        %s944 = scalar_lea.sflag [#allocation5], %s943
        %s945 = sand.u32 %s94, 1
        %s946 = smul.addr %s945, 2
        %s947 = scalar_lea.vmem [#allocation8], %s946
        // Predicated region
        $region45: #{tpu_custom_call.1} parent=27 // pred_check
          %p948 = pneg %p104
        $region46: #{tpu_custom_call.1} parent=27 // pred_check_branch
          %950 = sbr.rel (%p948) target = $region48
        $region47: #{tpu_custom_call.1} parent=27 // pred_region
          %s952 = ssub.s32 32, 32
          %953 = vsyncadd %s944, %s952
          %s954 = smul.addr %s26, 2
          %s955 = smul.addr %s954, 16
          %s956 = scalar_lea.hbm %s2, %s955
          %s958 = sshll.u32 %s947, 4
          %s959 = int_to_ptr.vmem [resolvable:$true] %s958
          %961 = dma.vmem_to_hbm [thread:$0]  %s959, 32, %s956, %s944
        $region48: #{tpu_custom_call.1} parent=27 // pred_fallthru
          _
      $region28: #{tpu_custom_call.1} parent=5 // pred_fallthru
        _
      %p962 = scmp.le.s32.totalorder 2, %s17
      // Predicated region
      $region49: #{tpu_custom_call.1} parent=5 // pred_check
        %p963 = pneg %p962
      $region50: #{tpu_custom_call.1} parent=5 // pred_check_branch
        %965 = sbr.rel (%p963) target = $region52
      $region51: #{tpu_custom_call.1} parent=5 // pred_region
        %s966 = ssub.s32 %s17, 2
        // Predicated region
        $region53: #{tpu_custom_call.1} parent=51 // pred_check
          %p967 = pneg %p110
        $region54: #{tpu_custom_call.1} parent=51 // pred_check_branch
          %969 = sbr.rel (%p967) target = $region56
        $region55: #{tpu_custom_call.1} parent=51 // pred_region
          %s970 = sand.u32 %s95, 1
          %s971 = scalar_lea.sflag [#allocation5], %s970
          %s972 = sand.u32 %s95, 1
          %s973 = smul.addr %s972, 2
          %s974 = scalar_lea.vmem [#allocation8], %s973
          %975 = dma.done %s971, 32
        $region56: #{tpu_custom_call.1} parent=51 // pred_fallthru
          _
      $region52: #{tpu_custom_call.1} parent=5 // pred_fallthru
        _
    $region6: #{tpu_custom_call.1} parent=1 // loop_footer
      %s21 = sadd.s32 1, %s17
    $region7: #{tpu_custom_call.1} parent=1 // loop_footer_branch
      %16 = sbr.rel target = $region3
    $region8: #{tpu_custom_call.1} parent=1 // loop_exit
      _
    %976 = vsyncpa [#allocation4], 1
    %s977 = scalar_lea.sflag [#allocation4], 1
    %978 = vsyncpa %s977, 1
    %979 = vsyncpa [#allocation7], 1
    %s980 = scalar_lea.sflag [#allocation7], 1
    %981 = vsyncpa %s980, 1
    %982 = vsyncpa [#allocation5], 1
    %s983 = scalar_lea.sflag [#allocation5], 1
    %984 = vsyncpa %s983, 1

</llo_original>
